<compile_context>
chip_gen: v6e
topology: v6e:2x2x1
jax: 0.10.0
libtpu: 0.0.40
codegen_flags: <defaults>
</compile_context>

<pallas_src>
import functools

import numpy as np
import jax
import jax.numpy as jnp
from jax.experimental import pallas as pl
from jax.experimental.pallas import tpu as pltpu


def _pos_embed_kernel(sel_ref, tables_ref, out_ref, *, num_rows, F, L):
    """Single-step kernel building both halves of the (2, F, H*W) slab.

    half c == 0 -> col half: out[0, f, k] = col_weight[k %  W, f]
    half c == 1 -> row half: out[1, f, k] = row_weight[k // W, f]

    sel_ref:    (2, 1, L) int32     per-lane source embedding-row index
    tables_ref: (2, F, num_rows)    pre-transposed {col, row} embedding tables
    out_ref:    (2, F, L)           lane-dense output (L = H*W on lanes)
    """
    # Embedding-row iota shared by both halves; built once.
    row_ids = jax.lax.broadcasted_iota(jnp.int32, (num_rows, L), 0)
    for c in range(2):  # static 2-way unroll: col half, row half
        # Exact 0/1 one-hot: every lane k selects exactly one table row.
        one_hot = (row_ids == sel_ref[c]).astype(tables_ref.dtype)     # (num_rows, L)
        half = jnp.dot(tables_ref[c], one_hot,
                       preferred_element_type=jnp.float32)             # (F, L), exact
        out_ref[c] = half.astype(out_ref.dtype)


def position_embedding_learned(x, col_weight, row_weight):
    """x: (B, C, H, W); col_weight/row_weight: (50, F). Returns (B, 2F, H, W)."""
    B, _, H, W = x.shape
    num_rows, F = col_weight.shape
    assert row_weight.shape == (num_rows, F)
    assert H <= num_rows and W <= num_rows

    L = H * W

    # Tiny one-time parameter glue outside the kernel: pre-transpose and stack
    # the two embedding tables so the kernel indexes half c directly.
    tables = jnp.stack(
        [jnp.transpose(col_weight), jnp.transpose(row_weight)], axis=0
    )  # (2, F, num_rows)

    # Static per-lane source indices for the flattened H*W lane axis.
    k = np.arange(L, dtype=np.int64)
    sel_np = np.stack([k % W, k // W], axis=0).astype(np.int32)[:, None, :]  # (2,1,L)
    sel = jnp.asarray(sel_np)

    kernel = functools.partial(_pos_embed_kernel, num_rows=num_rows, F=F, L=L)

    pos2 = pl.pallas_call(
        kernel,
        out_shape=jax.ShapeDtypeStruct((2, F, L), col_weight.dtype),
        # No grid: one invocation, everything resident in VMEM (tables + sel +
        # output are well under even v7x's 64 MiB).
        in_specs=[
            pl.BlockSpec(memory_space=pltpu.MemorySpace.VMEM),
            pl.BlockSpec(memory_space=pltpu.MemorySpace.VMEM),
        ],
        out_specs=pl.BlockSpec(memory_space=pltpu.MemorySpace.VMEM),
    )(sel, tables)

    # Free layout plumbing: (2, F, H*W) is bit-identical to (2F, H, W)
    # contiguous; the batch repeat is a pure broadcast (batch-invariant).
    # TODO(synk): at scale, fuse this batch broadcast into the consumer kernel
    # instead of materializing B identical copies.
    pos = pos2.reshape(2 * F, H, W)
    return jnp.broadcast_to(pos[None], (B, 2 * F, H, W))


def _reference(x, col_weight, row_weight):
    """Pure-JAX transcription of the PyTorch forward, for verification."""
    B, _, H, W = x.shape
    F = col_weight.shape[1]
    x_emb = col_weight[:W]                       # col_embed(arange(W)) -> (W, F)
    y_emb = row_weight[:H]                       # row_embed(arange(H)) -> (H, F)
    pos = jnp.concatenate(
        [
            jnp.broadcast_to(x_emb[None, :, :], (H, W, F)),   # repeat over rows
            jnp.broadcast_to(y_emb[:, None, :], (H, W, F)),   # repeat over cols
        ],
        axis=-1,
    )                                            # (H, W, 2F)
    pos = jnp.transpose(pos, (2, 0, 1))          # (2F, H, W)
    return jnp.broadcast_to(pos[None], (B, 2 * F, H, W))


if __name__ == "__main__":
    # Small shapes consistent with the module: batch=2, channels=4,
    # spatial 16x16, num_pos_feats=32 (embedding tables are (50, 32)).
    B, C, H, W = 2, 4, 16, 16
    num_pos_feats = 32

    key = jax.random.PRNGKey(0)
    k_x, k_row, k_col = jax.random.split(key, 3)

    x = jax.random.normal(k_x, (B, C, H, W), dtype=jnp.float32)
    # nn.init.uniform_ -> U[0, 1)
    row_weight = jax.random.uniform(k_row, (50, num_pos_feats), dtype=jnp.float32)
    col_weight = jax.random.uniform(k_col, (50, num_pos_feats), dtype=jnp.float32)

    pos = position_embedding_learned(x, col_weight, row_weight)
    pos = jax.block_until_ready(pos)

    ref = _reference(x, col_weight, row_weight)
    assert pos.shape == (B, 2 * num_pos_feats, H, W), pos.shape
    assert jnp.allclose(pos, ref), "Pallas output mismatch vs reference"

    print("KERNEL_OK")
</pallas_src>

<mosaic_0001>
module attributes {stable_mosaic.version = 11 : i64} {
  func.func @_pos_embed_kernel(%arg0: memref<2x1x256xi32, #tpu.memory_space<vmem>>, %arg1: memref<2x32x50xf32, #tpu.memory_space<vmem>>, %arg2: memref<2x32x256xf32, #tpu.memory_space<vmem>>) attributes {dimension_semantics = [], scalar_prefetch = 0 : i64, scratch_operands = 0 : i64, tpu.core_type = #tpu.core_type<tc>} {
    %0 = tpu.iota {dimensions = array<i32: 0>} : vector<50x256xi32>
    %c0 = arith.constant 0 : index
    %c0_0 = arith.constant 0 : index
    %c0_1 = arith.constant 0 : index
    %1 = vector.load %arg0[%c0, %c0_0, %c0_1] : memref<2x1x256xi32, #tpu.memory_space<vmem>>, vector<1x1x256xi32>
    %2 = vector.shape_cast %1 : vector<1x1x256xi32> to vector<1x256xi32>
    %3 = vector.broadcast %2 : vector<1x256xi32> to vector<50x256xi32>
    %4 = arith.cmpi eq, %0, %3 : vector<50x256xi32>
    %5 = arith.extui %4 : vector<50x256xi1> to vector<50x256xi32>
    %6 = arith.sitofp %5 : vector<50x256xi32> to vector<50x256xf32>
    %c0_2 = arith.constant 0 : index
    %c0_3 = arith.constant 0 : index
    %c0_4 = arith.constant 0 : index
    %7 = vector.load %arg1[%c0_2, %c0_3, %c0_4] : memref<2x32x50xf32, #tpu.memory_space<vmem>>, vector<1x32x50xf32>
    %8 = vector.shape_cast %7 : vector<1x32x50xf32> to vector<32x50xf32>
    %cst = arith.constant dense<0.000000e+00> : vector<32x256xf32>
    %9 = tpu.matmul %8, %6, %cst {dimension_numbers = #tpu.dot_dimension_numbers<[1], [0], [0], [1], [0, 0, 1, 1], [], []>} : vector<32x50xf32>, vector<50x256xf32>, vector<32x256xf32> -> vector<32x256xf32>
    %c0_5 = arith.constant 0 : index
    %c0_6 = arith.constant 0 : index
    %c0_7 = arith.constant 0 : index
    %10 = vector.load %arg2[%c0_5, %c0_6, %c0_7] : memref<2x32x256xf32, #tpu.memory_space<vmem>>, vector<1x32x256xf32>
    %11 = vector.shape_cast %10 : vector<1x32x256xf32> to vector<32x256xf32>
    %12 = vector.shape_cast %9 : vector<32x256xf32> to vector<1x32x256xf32>
    tpu.vector_store %arg2[%c0_5, %c0_6, %c0_7], %12 {strides = array<i32>} : memref<2x32x256xf32, #tpu.memory_space<vmem>>, vector<1x32x256xf32>,
    %c1 = arith.constant 1 : index
    %c0_8 = arith.constant 0 : index
    %c0_9 = arith.constant 0 : index
    %13 = vector.load %arg0[%c1, %c0_8, %c0_9] : memref<2x1x256xi32, #tpu.memory_space<vmem>>, vector<1x1x256xi32>
    %14 = vector.shape_cast %13 : vector<1x1x256xi32> to vector<1x256xi32>
    %15 = vector.broadcast %14 : vector<1x256xi32> to vector<50x256xi32>
    %16 = arith.cmpi eq, %0, %15 : vector<50x256xi32>
    %17 = arith.extui %16 : vector<50x256xi1> to vector<50x256xi32>
    %18 = arith.sitofp %17 : vector<50x256xi32> to vector<50x256xf32>
    %c1_10 = arith.constant 1 : index
    %c0_11 = arith.constant 0 : index
    %c0_12 = arith.constant 0 : index
    %19 = vector.load %arg1[%c1_10, %c0_11, %c0_12] : memref<2x32x50xf32, #tpu.memory_space<vmem>>, vector<1x32x50xf32>
    %20 = vector.shape_cast %19 : vector<1x32x50xf32> to vector<32x50xf32>
    %cst_13 = arith.constant dense<0.000000e+00> : vector<32x256xf32>
    %21 = tpu.matmul %20, %18, %cst_13 {dimension_numbers = #tpu.dot_dimension_numbers<[1], [0], [0], [1], [0, 0, 1, 1], [], []>} : vector<32x50xf32>, vector<50x256xf32>, vector<32x256xf32> -> vector<32x256xf32>
    %c1_14 = arith.constant 1 : index
    %c0_15 = arith.constant 0 : index
    %c0_16 = arith.constant 0 : index
    %22 = vector.load %arg2[%c1_14, %c0_15, %c0_16] : memref<2x32x256xf32, #tpu.memory_space<vmem>>, vector<1x32x256xf32>
    %23 = vector.shape_cast %22 : vector<1x32x256xf32> to vector<32x256xf32>
    %24 = vector.shape_cast %21 : vector<32x256xf32> to vector<1x32x256xf32>
    tpu.vector_store %arg2[%c1_14, %c0_15, %c0_16], %24 {strides = array<i32>} : memref<2x32x256xf32, #tpu.memory_space<vmem>>, vector<1x32x256xf32>,
    return
  }
}

</mosaic_0001>

<llo_original>
// kernel: tpu_custom_call.1
$region0: #{tpu_custom_call.1}
  #allocation0 [shape = 'u32[]', space=smem, size = 0x4, offset = 0x4, fixed_abs, tag = 'smem constant byte address 0x4 - core index']
  #allocation1 [shape = 'u32[144,128]{1,0:T(1,128)}', space=vmem, size = 0x12000, scoped, tag = 'internal scratch']
  %s0 = inlined_call_operand.hbm [shape: s32[2,1,256], index: 0, kind: input, shape index: {}]
  %s1 = inlined_call_operand.hbm [shape: f32[2,32,50], index: 1, kind: input, shape index: {}]
  %s2 = inlined_call_operand.hbm [shape: f32[2,32,256], index: 2, kind: output, shape index: {}]
  %s3 = sld [smem:[#allocation0]]
  $region26: #{tpu_custom_call.1} parent=0
    _
  %s5 = ssub.s32 1, %s3
  %s6 = scalar_select 0, %s5, %s3
  $region1: #{tpu_custom_call.1} parent=0
    #allocation2 [shape = 'u8[2048]{0}', space=vmem, size = 0x800, scoped, tag = 'input window, operand 0, single buffered']
    #allocation3 [shape = 's32[1]{0}', space=sflag, size = 0x4, scoped, tag = 'scoped memory for tpu_custom_call.1']
    #allocation4 [shape = 's32[1]{0}', space=sflag, size = 0x4, scoped, tag = 'scoped memory for tpu_custom_call.1']
    #allocation5 [shape = 'u8[32768]{0}', space=vmem, size = 0x8000, scoped, tag = 'input window, operand 1, single buffered']
    #allocation6 [shape = 's32[1]{0}', space=sflag, size = 0x4, scoped, tag = 'scoped memory for tpu_custom_call.1']
    #allocation7 [shape = 'u8[65536]{0}', space=vmem, size = 0x10000, scoped, tag = 'output window, operand 0, single buffered']
    %7 = vsyncpa [#allocation3], 0
    %8 = vsyncpa [#allocation6], 0
    %9 = vsyncpa [#allocation4], 0
    // Predicated region
    $region2: #{tpu_custom_call.1} parent=1 // pred_check
      _
    $region3: #{tpu_custom_call.1} parent=1 // pred_check_branch
      %11 = sbr.rel (0) target = $region5
    $region4: #{tpu_custom_call.1} parent=1 // pred_region
      %s13 = ssub.s32 64, 64
      %14 = vsyncadd [#allocation3], %s13
      %s15 = sshll.u32 [#allocation2], 4
      %s16 = int_to_ptr.vmem [resolvable:$true] %s15
      %21 = dma.hbm_to_vmem [thread:$0]  %s0, 64, %s16, [#allocation3], 32, 32, 2
    $region5: #{tpu_custom_call.1} parent=1 // pred_fallthru
      _
    // Predicated region
    $region6: #{tpu_custom_call.1} parent=1 // pred_check
      _
    $region7: #{tpu_custom_call.1} parent=1 // pred_check_branch
      %23 = sbr.rel (0) target = $region9
    $region8: #{tpu_custom_call.1} parent=1 // pred_region
      %s25 = ssub.s32 1024, 1024
      %26 = vsyncadd [#allocation6], %s25
      %s27 = sshll.u32 [#allocation5], 4
      %s28 = int_to_ptr.vmem [resolvable:$true] %s27
      %33 = dma.hbm_to_vmem [thread:$0]  %s1, 1024, %s28, [#allocation6], 128, 128, 8
    $region9: #{tpu_custom_call.1} parent=1 // pred_fallthru
      _
    // Predicated region
    $region10: #{tpu_custom_call.1} parent=1 // pred_check
      _
    $region11: #{tpu_custom_call.1} parent=1 // pred_check_branch
      %35 = sbr.rel (0) target = $region13
    $region12: #{tpu_custom_call.1} parent=1 // pred_region
      %36 = dma.done [#allocation3], 64
    $region13: #{tpu_custom_call.1} parent=1 // pred_fallthru
      _
    // Predicated region
    $region14: #{tpu_custom_call.1} parent=1 // pred_check
      _
    $region15: #{tpu_custom_call.1} parent=1 // pred_check_branch
      %38 = sbr.rel (0) target = $region17
    $region16: #{tpu_custom_call.1} parent=1 // pred_region
      %39 = dma.done [#allocation6], 1024
    $region17: #{tpu_custom_call.1} parent=1 // pred_fallthru
      _
    %v40 = vlaneseq
    %v41 = vshrl.u32 %v40, 7
    %v42 = vadd.s32 %v41, 8
    %v43 = vadd.s32 %v41, 16
    %v44 = vadd.s32 %v41, 24
    %v45 = vadd.s32 %v41, 32
    %v46 = vadd.s32 %v41, 40
    %v47 = vadd.s32 %v41, 48
    %v48 = vld [vmem:[#allocation2] sm:$0x3]
    %v49 = vlaneseq
    %v50 = vshrl.u32 %v49, 7
    %v51 = vsub.s32 0, %v50
    %v52 = vrot.slane %v48, %v51
    %v53 = vlaneseq
    %v54 = vshrl.u32 %v53, 7
    %v55 = vsub.s32 1, %v54
    %v56 = vrot.slane %v48, %v55
    %vm57 = vcmp.eq.s32.totalorder %v41, %v52
    %vm58 = vcmp.eq.s32.totalorder %v41, %v56
    %vm59 = vcmp.eq.s32.totalorder %v42, %v52
    %vm60 = vcmp.eq.s32.totalorder %v42, %v56
    %vm61 = vcmp.eq.s32.totalorder %v43, %v52
    %vm62 = vcmp.eq.s32.totalorder %v43, %v56
    %vm63 = vcmp.eq.s32.totalorder %v44, %v52
    %vm64 = vcmp.eq.s32.totalorder %v44, %v56
    %vm65 = vcmp.eq.s32.totalorder %v45, %v52
    %vm66 = vcmp.eq.s32.totalorder %v45, %v56
    %vm67 = vcmp.eq.s32.totalorder %v46, %v52
    %vm68 = vcmp.eq.s32.totalorder %v46, %v56
    %vm69 = vcmp.eq.s32.totalorder %v47, %v52
    %vm70 = vcmp.eq.s32.totalorder %v47, %v56
    %v71 = vsel %vm57, 1, 0
    %v72 = vsel %vm58, 1, 0
    %v73 = vsel %vm59, 1, 0
    %v74 = vsel %vm60, 1, 0
    %v75 = vsel %vm61, 1, 0
    %v76 = vsel %vm62, 1, 0
    %v77 = vsel %vm63, 1, 0
    %v78 = vsel %vm64, 1, 0
    %v79 = vsel %vm65, 1, 0
    %v80 = vsel %vm66, 1, 0
    %v81 = vsel %vm67, 1, 0
    %v82 = vsel %vm68, 1, 0
    %v83 = vsel %vm69, 1, 0
    %v84 = vsel %vm70, 1, 0
    %v85 = vcvt.s32.f32 %v71
    %v86 = vcvt.s32.f32 %v72
    %v87 = vcvt.s32.f32 %v73
    %v88 = vcvt.s32.f32 %v74
    %v89 = vcvt.s32.f32 %v75
    %v90 = vcvt.s32.f32 %v76
    %v91 = vcvt.s32.f32 %v77
    %v92 = vcvt.s32.f32 %v78
    %v93 = vcvt.s32.f32 %v79
    %v94 = vcvt.s32.f32 %v80
    %v95 = vcvt.s32.f32 %v81
    %v96 = vcvt.s32.f32 %v82
    %v97 = vcvt.s32.f32 %v83
    %v98 = vcvt.s32.f32 %v84
    %v99 = vld [vmem:[#allocation5] sm:$0xff]
    %v100 = vld [vmem:[#allocation5 + $0x8] sm:$0xff]
    %v101 = vld [vmem:[#allocation5 + $0x10] sm:$0xff]
    %v102 = vld [vmem:[#allocation5 + $0x18] sm:$0xff]
    %vm103 = vcmask 408576
    %v105 = vsel %vm103, %v99, 0
    %v108 = vsel %vm103, %v100, 0
    %v111 = vsel %vm103, %v101, 0
    %v114 = vsel %vm103, %v102, 0
    %vm116 = vcmask 1041408
    %v118 = vsel %vm116, %v97, 0
    %v121 = vsel %vm116, %v98, 0
    %123 = vmatprep.subr.mxu0 0.0
    %124 = vmatpush1.msra.mxu0 0.0
    %125 = vmatprep.subr.mxu0 0.0
    %126 = vmatpush1.msra.mxu0 0.0
    %127 = vmatprep.subr.mxu0 0.0
    %128 = vmatpush1.msra.mxu0 0.0
    %129 = vmatprep.subr.mxu0 0.0
    %130 = vmatpush1.msra.mxu0 0.0
    %131 = vmatprep.subr.mxu0 0.0
    %132 = vmatpush1.msra.mxu0 0.0
    %133 = vmatprep.subr.mxu0 0.0
    %134 = vmatpush1.msra.mxu0 0.0
    %135 = vmatprep.subr.mxu0 0.0
    %136 = vmatpush1.msra.mxu0 0.0
    %137 = vmatprep.subr.mxu0 0.0
    %138 = vmatpush1.msra.mxu0 0.0
    %139 = vmatprep.subr.mxu0 0.0
    %140 = vmatpush1.msra.mxu0 0.0
    %141 = vmatprep.subr.mxu0 %v121
    %142 = vmatpush1.msra.mxu0 %v118
    %143 = vmatprep.subr.mxu0 %v96
    %144 = vmatpush1.msra.mxu0 %v95
    %145 = vmatprep.subr.mxu0 %v94
    %146 = vmatpush1.msra.mxu0 %v93
    %147 = vmatprep.subr.mxu0 %v92
    %148 = vmatpush1.msra.mxu0 %v91
    %149 = vmatprep.subr.mxu0 %v90
    %150 = vmatpush1.msra.mxu0 %v89
    %151 = vmatprep.subr.mxu0 %v88
    %152 = vmatpush1.msra.mxu0 %v87
    %153 = vmatprep.subr.mxu0 %v86
    %154 = vmatpush1.msra.mxu0 %v85
    %155 = vmatprep.subr.mxu0 0.0
    %156 = vmatpush2.msra.mxu0 0.0
    %157 = vmatprep.subr.mxu0 0.0
    %158 = vmatpush2.msra.mxu0 0.0
    %159 = vmatprep.subr.mxu0 0.0
    %160 = vmatpush2.msra.mxu0 0.0
    %161 = vmatprep.subr.mxu0 0.0
    %162 = vmatpush2.msra.mxu0 0.0
    %163 = vmatprep.subr.mxu0 0.0
    %164 = vmatpush2.msra.mxu0 0.0
    %165 = vmatprep.subr.mxu0 0.0
    %166 = vmatpush2.msra.mxu0 0.0
    %167 = vmatprep.subr.mxu0 0.0
    %168 = vmatpush2.msra.mxu0 0.0
    %169 = vmatprep.subr.mxu0 0.0
    %170 = vmatpush2.msra.mxu0 0.0
    %171 = vmatprep.subr.mxu0 0.0
    %172 = vmatpush2.msra.mxu0 0.0
    %173 = vmatprep.subr.mxu0 0.0
    %174 = vmatpush2.msra.mxu0 0.0
    %175 = vmatprep.subr.mxu0 0.0
    %176 = vmatpush2.msra.mxu0 0.0
    %177 = vmatprep.subr.mxu0 0.0
    %178 = vmatpush2.msra.mxu0 0.0
    %179 = vmatprep.subr.mxu0 0.0
    %180 = vmatpush2.msra.mxu0 0.0
    %181 = vmatprep.subr.mxu0 0.0
    %182 = vmatpush2.msra.mxu0 0.0
    %183 = vmatprep.subr.mxu0 0.0
    %184 = vmatpush2.msra.mxu0 0.0
    %185 = vmatprep.subr.mxu0 0.0
    %186 = vmatpush2.msra.mxu0 0.0
    %187 = vmatprep.mubr.f32.mxu0 0.0
    %188 = vmatmul.mubr.f32.gmra.mxu0 %v105
    %v189 = vpop.f32.mrf.mxu0
    %v190 = vadd.f32 0.0, %v189
    %v191 = vpop.f32.mrf.mxu0
    %v192 = vadd.f32 0.0, %v191
    %193 = vmatprep.mubr.f32.mxu0 0.0
    %194 = vmatmul.mubr.f32.gmra.mxu0 %v108
    %v195 = vpop.f32.mrf.mxu0
    %v196 = vadd.f32 0.0, %v195
    %v197 = vpop.f32.mrf.mxu0
    %v198 = vadd.f32 0.0, %v197
    %199 = vmatprep.mubr.f32.mxu0 0.0
    %200 = vmatmul.mubr.f32.gmra.mxu0 %v111
    %v201 = vpop.f32.mrf.mxu0
    %v202 = vadd.f32 0.0, %v201
    %v203 = vpop.f32.mrf.mxu0
    %v204 = vadd.f32 0.0, %v203
    %205 = vmatprep.mubr.f32.mxu0 0.0
    %206 = vmatmul.mubr.f32.gmra.mxu0 %v114
    %v207 = vpop.f32.mrf.mxu0
    %v208 = vadd.f32 0.0, %v207
    %v209 = vpop.f32.mrf.mxu0
    %v210 = vadd.f32 0.0, %v209
    %211 = vdwg.mxu0
    %212 = vst [vmem:[#allocation7] sm:$0xff] %v190
    %213 = vst [vmem:[#allocation7 + $0x8] sm:$0xff] %v192
    %214 = vst [vmem:[#allocation7 + $0x10] sm:$0xff] %v196
    %215 = vst [vmem:[#allocation7 + $0x18] sm:$0xff] %v198
    %216 = vst [vmem:[#allocation7 + $0x20] sm:$0xff] %v202
    %217 = vst [vmem:[#allocation7 + $0x28] sm:$0xff] %v204
    %218 = vst [vmem:[#allocation7 + $0x30] sm:$0xff] %v208
    %219 = vst [vmem:[#allocation7 + $0x38] sm:$0xff] %v210
    %s220 = scalar_lea.vmem [#allocation2], 2
    %v221 = vld [vmem:[%s220] sm:$0x3]
    %v222 = vlaneseq
    %v223 = vshrl.u32 %v222, 7
    %v224 = vsub.s32 0, %v223
    %v225 = vrot.slane %v221, %v224
    %v226 = vlaneseq
    %v227 = vshrl.u32 %v226, 7
    %v228 = vsub.s32 1, %v227
    %v229 = vrot.slane %v221, %v228
    %vm230 = vcmp.eq.s32.totalorder %v41, %v225
    %vm231 = vcmp.eq.s32.totalorder %v41, %v229
    %vm232 = vcmp.eq.s32.totalorder %v42, %v225
    %vm233 = vcmp.eq.s32.totalorder %v42, %v229
    %vm234 = vcmp.eq.s32.totalorder %v43, %v225
    %vm235 = vcmp.eq.s32.totalorder %v43, %v229
    %vm236 = vcmp.eq.s32.totalorder %v44, %v225
    %vm237 = vcmp.eq.s32.totalorder %v44, %v229
    %vm238 = vcmp.eq.s32.totalorder %v45, %v225
    %vm239 = vcmp.eq.s32.totalorder %v45, %v229
    %vm240 = vcmp.eq.s32.totalorder %v46, %v225
    %vm241 = vcmp.eq.s32.totalorder %v46, %v229
    %vm242 = vcmp.eq.s32.totalorder %v47, %v225
    %vm243 = vcmp.eq.s32.totalorder %v47, %v229
    %v244 = vsel %vm230, 1, 0
    %v245 = vsel %vm231, 1, 0
    %v246 = vsel %vm232, 1, 0
    %v247 = vsel %vm233, 1, 0
    %v248 = vsel %vm234, 1, 0
    %v249 = vsel %vm235, 1, 0
    %v250 = vsel %vm236, 1, 0
    %v251 = vsel %vm237, 1, 0
    %v252 = vsel %vm238, 1, 0
    %v253 = vsel %vm239, 1, 0
    %v254 = vsel %vm240, 1, 0
    %v255 = vsel %vm241, 1, 0
    %v256 = vsel %vm242, 1, 0
    %v257 = vsel %vm243, 1, 0
    %v258 = vcvt.s32.f32 %v244
    %v259 = vcvt.s32.f32 %v245
    %v260 = vcvt.s32.f32 %v246
    %v261 = vcvt.s32.f32 %v247
    %v262 = vcvt.s32.f32 %v248
    %v263 = vcvt.s32.f32 %v249
    %v264 = vcvt.s32.f32 %v250
    %v265 = vcvt.s32.f32 %v251
    %v266 = vcvt.s32.f32 %v252
    %v267 = vcvt.s32.f32 %v253
    %v268 = vcvt.s32.f32 %v254
    %v269 = vcvt.s32.f32 %v255
    %v270 = vcvt.s32.f32 %v256
    %v271 = vcvt.s32.f32 %v257
    %s272 = scalar_lea.vmem [#allocation5], 32
    %v273 = vld [vmem:[%s272] sm:$0xff]
    %v274 = vld [vmem:[%s272 + $0x8] sm:$0xff]
    %v275 = vld [vmem:[%s272 + $0x10] sm:$0xff]
    %v276 = vld [vmem:[%s272 + $0x18] sm:$0xff]
    %v278 = vsel %vm103, %v273, 0
    %v281 = vsel %vm103, %v274, 0
    %v284 = vsel %vm103, %v275, 0
    %v287 = vsel %vm103, %v276, 0
    %v290 = vsel %vm116, %v270, 0
    %v293 = vsel %vm116, %v271, 0
    %295 = vmatprep.subr.mxu0 0.0
    %296 = vmatpush1.msra.mxu0 0.0
    %297 = vmatprep.subr.mxu0 0.0
    %298 = vmatpush1.msra.mxu0 0.0
    %299 = vmatprep.subr.mxu0 0.0
    %300 = vmatpush1.msra.mxu0 0.0
    %301 = vmatprep.subr.mxu0 0.0
    %302 = vmatpush1.msra.mxu0 0.0
    %303 = vmatprep.subr.mxu0 0.0
    %304 = vmatpush1.msra.mxu0 0.0
    %305 = vmatprep.subr.mxu0 0.0
    %306 = vmatpush1.msra.mxu0 0.0
    %307 = vmatprep.subr.mxu0 0.0
    %308 = vmatpush1.msra.mxu0 0.0
    %309 = vmatprep.subr.mxu0 0.0
    %310 = vmatpush1.msra.mxu0 0.0
    %311 = vmatprep.subr.mxu0 0.0
    %312 = vmatpush1.msra.mxu0 0.0
    %313 = vmatprep.subr.mxu0 %v293
    %314 = vmatpush1.msra.mxu0 %v290
    %315 = vmatprep.subr.mxu0 %v269
    %316 = vmatpush1.msra.mxu0 %v268
    %317 = vmatprep.subr.mxu0 %v267
    %318 = vmatpush1.msra.mxu0 %v266
    %319 = vmatprep.subr.mxu0 %v265
    %320 = vmatpush1.msra.mxu0 %v264
    %321 = vmatprep.subr.mxu0 %v263
    %322 = vmatpush1.msra.mxu0 %v262
    %323 = vmatprep.subr.mxu0 %v261
    %324 = vmatpush1.msra.mxu0 %v260
    %325 = vmatprep.subr.mxu0 %v259
    %326 = vmatpush1.msra.mxu0 %v258
    %327 = vmatprep.subr.mxu0 0.0
    %328 = vmatpush2.msra.mxu0 0.0
    %329 = vmatprep.subr.mxu0 0.0
    %330 = vmatpush2.msra.mxu0 0.0
    %331 = vmatprep.subr.mxu0 0.0
    %332 = vmatpush2.msra.mxu0 0.0
    %333 = vmatprep.subr.mxu0 0.0
    %334 = vmatpush2.msra.mxu0 0.0
    %335 = vmatprep.subr.mxu0 0.0
    %336 = vmatpush2.msra.mxu0 0.0
    %337 = vmatprep.subr.mxu0 0.0
    %338 = vmatpush2.msra.mxu0 0.0
    %339 = vmatprep.subr.mxu0 0.0
    %340 = vmatpush2.msra.mxu0 0.0
    %341 = vmatprep.subr.mxu0 0.0
    %342 = vmatpush2.msra.mxu0 0.0
    %343 = vmatprep.subr.mxu0 0.0
    %344 = vmatpush2.msra.mxu0 0.0
    %345 = vmatprep.subr.mxu0 0.0
    %346 = vmatpush2.msra.mxu0 0.0
    %347 = vmatprep.subr.mxu0 0.0
    %348 = vmatpush2.msra.mxu0 0.0
    %349 = vmatprep.subr.mxu0 0.0
    %350 = vmatpush2.msra.mxu0 0.0
    %351 = vmatprep.subr.mxu0 0.0
    %352 = vmatpush2.msra.mxu0 0.0
    %353 = vmatprep.subr.mxu0 0.0
    %354 = vmatpush2.msra.mxu0 0.0
    %355 = vmatprep.subr.mxu0 0.0
    %356 = vmatpush2.msra.mxu0 0.0
    %357 = vmatprep.subr.mxu0 0.0
    %358 = vmatpush2.msra.mxu0 0.0
    %359 = vmatprep.mubr.f32.mxu0 0.0
    %360 = vmatmul.mubr.f32.gmra.mxu0 %v278
    %v361 = vpop.f32.mrf.mxu0
    %v362 = vadd.f32 0.0, %v361
    %v363 = vpop.f32.mrf.mxu0
    %v364 = vadd.f32 0.0, %v363
    %365 = vmatprep.mubr.f32.mxu0 0.0
    %366 = vmatmul.mubr.f32.gmra.mxu0 %v281
    %v367 = vpop.f32.mrf.mxu0
    %v368 = vadd.f32 0.0, %v367
    %v369 = vpop.f32.mrf.mxu0
    %v370 = vadd.f32 0.0, %v369
    %371 = vmatprep.mubr.f32.mxu0 0.0
    %372 = vmatmul.mubr.f32.gmra.mxu0 %v284
    %v373 = vpop.f32.mrf.mxu0
    %v374 = vadd.f32 0.0, %v373
    %v375 = vpop.f32.mrf.mxu0
    %v376 = vadd.f32 0.0, %v375
    %377 = vmatprep.mubr.f32.mxu0 0.0
    %378 = vmatmul.mubr.f32.gmra.mxu0 %v287
    %v379 = vpop.f32.mrf.mxu0
    %v380 = vadd.f32 0.0, %v379
    %v381 = vpop.f32.mrf.mxu0
    %v382 = vadd.f32 0.0, %v381
    %383 = vdwg.mxu0
    %s384 = scalar_lea.vmem [#allocation7], 64
    %385 = vst [vmem:[%s384] sm:$0xff] %v362
    %386 = vst [vmem:[%s384 + $0x8] sm:$0xff] %v364
    %387 = vst [vmem:[%s384 + $0x10] sm:$0xff] %v368
    %388 = vst [vmem:[%s384 + $0x18] sm:$0xff] %v370
    %389 = vst [vmem:[%s384 + $0x20] sm:$0xff] %v374
    %390 = vst [vmem:[%s384 + $0x28] sm:$0xff] %v376
    %391 = vst [vmem:[%s384 + $0x30] sm:$0xff] %v380
    %392 = vst [vmem:[%s384 + $0x38] sm:$0xff] %v382
    // Predicated region
    $region18: #{tpu_custom_call.1} parent=1 // pred_check
      _
    $region19: #{tpu_custom_call.1} parent=1 // pred_check_branch
      %394 = sbr.rel (0) target = $region21
    $region20: #{tpu_custom_call.1} parent=1 // pred_region
      %s396 = ssub.s32 2048, 2048
      %397 = vsyncadd [#allocation4], %s396
      %s398 = sshll.u32 [#allocation7], 4
      %s399 = int_to_ptr.vmem [resolvable:$true] %s398
      %404 = dma.vmem_to_hbm [thread:$0]  %s399, 2048, %s2, [#allocation4], 256, 256, 16
    $region21: #{tpu_custom_call.1} parent=1 // pred_fallthru
      _
    // Predicated region
    $region22: #{tpu_custom_call.1} parent=1 // pred_check
      _
    $region23: #{tpu_custom_call.1} parent=1 // pred_check_branch
      %406 = sbr.rel (0) target = $region25
    $region24: #{tpu_custom_call.1} parent=1 // pred_region
      %407 = dma.done [#allocation4], 2048
    $region25: #{tpu_custom_call.1} parent=1 // pred_fallthru
      _
    %408 = vsyncpa [#allocation3], 1
    %409 = vsyncpa [#allocation6], 1
    %410 = vsyncpa [#allocation4], 1

</llo_original>
